<compile_context>
chip_gen: v6e
topology: v6e:2x2x1
jax: 0.10.0
libtpu: 0.0.40
codegen_flags: <defaults>
</compile_context>

<pallas_src>
import jax
import jax.numpy as jnp
from jax import lax
from jax.experimental import pallas as pl
from jax.experimental.pallas import tpu as pltpu

_LANES = 128
_SUBLANES = 8
_STRIP_ROWS = 512          # 256 KiB f32 per input strip -> bounded temporaries


def _round_up(x, m):
    return ((x + m - 1) // m) * m


def _cdiv(a, b):
    return (a + b - 1) // b


def _row_align(dtype):
    # Second-to-last block dim must be a multiple of the packed sublane count
    # (8 for 32-bit, 16 for 16-bit, 32 for 8-bit dtypes).
    return _SUBLANES * max(1, 4 // dtype.itemsize)


def _make_dice_kernel(rows, block_rows, strip, grid):
    """Per-block partial-sum kernel. All sizes are trace-time Python ints."""
    n_strips_full = block_rows // strip
    valid_last = rows - (grid - 1) * block_rows      # valid rows in last block
    n_strips_last = _cdiv(valid_last, strip)
    last_is_partial = valid_last < block_rows

    def strip_step(pred_ref, tar_ref, inter_ref, union_ref, j, masked):
        r0 = pl.multiple_of(j * strip, strip)
        p = pred_ref[pl.ds(r0, strip), :].astype(jnp.float32)
        t = tar_ref[pl.ds(r0, strip), :].astype(jnp.float32)
        # sigmoid(x) = 0.5*tanh(0.5*x) + 0.5 : a single EUP op per vreg.
        s = 0.5 * jnp.tanh(0.5 * p) + 0.5
        if masked:
            # Mask rows past the end of the array in the partial last block.
            # (jnp.where is a select, so stale/garbage VMEM rows — even NaN —
            # cannot leak into the sums.)
            row = r0 + lax.broadcasted_iota(jnp.int32, (strip, _LANES), 0)
            keep = row < valid_last
            s = jnp.where(keep, s, 0.0)
            t = jnp.where(keep, t, 0.0)
        # Tile-aligned view (strip//8, 8, 128); reduce only the leading axis:
        # pure VPU adds into an (8, 128) vreg-shaped partial, no XLU, no SMEM.
        ss = s.reshape(-1, _SUBLANES, _LANES)
        tt = t.reshape(-1, _SUBLANES, _LANES)
        inter_ref[...] += jnp.sum(ss * tt, axis=0)
        union_ref[...] += jnp.sum(ss + tt, axis=0)

    def kernel(pred_ref, tar_ref, inter_ref, union_ref):
        inter_ref[...] = jnp.zeros((_SUBLANES, _LANES), jnp.float32)
        union_ref[...] = jnp.zeros((_SUBLANES, _LANES), jnp.float32)

        def run(n_strips, masked):
            def body(j, carry):
                strip_step(pred_ref, tar_ref, inter_ref, union_ref, j, masked)
                return carry
            lax.fori_loop(0, n_strips, body, 0, unroll=(n_strips <= 4))

        if not last_is_partial:
            run(n_strips_full, masked=False)
        else:
            i = pl.program_id(0)

            @pl.when(i < grid - 1)
            def _():
                run(n_strips_full, masked=False)

            @pl.when(i == grid - 1)
            def _():
                # Only strips containing valid rows; tail rows masked above.
                run(n_strips_last, masked=True)

    return kernel


def _dice_partial_sums(pred2d, tar2d, rows, block_rows, strip, grid):
    kernel = _make_dice_kernel(rows, block_rows, strip, grid)
    n_elems = rows * _LANES
    cost = pl.CostEstimate(
        flops=8 * n_elems,
        transcendentals=n_elems,
        bytes_accessed=(pred2d.size * pred2d.dtype.itemsize
                        + tar2d.size * tar2d.dtype.itemsize
                        + 2 * grid * _SUBLANES * _LANES * 4),
    )
    inter_parts, union_parts = pl.pallas_call(
        kernel,
        out_shape=(
            jax.ShapeDtypeStruct((grid * _SUBLANES, _LANES), jnp.float32),
            jax.ShapeDtypeStruct((grid * _SUBLANES, _LANES), jnp.float32),
        ),
        grid_spec=pltpu.PrefetchScalarGridSpec(
            num_scalar_prefetch=0,
            grid=(grid,),
            in_specs=[
                pl.BlockSpec((block_rows, _LANES), lambda i: (i, 0)),
                pl.BlockSpec((block_rows, _LANES), lambda i: (i, 0)),
            ],
            out_specs=(
                pl.BlockSpec((_SUBLANES, _LANES), lambda i: (i, 0)),
                pl.BlockSpec((_SUBLANES, _LANES), lambda i: (i, 0)),
            ),
        ),
        compiler_params=pltpu.CompilerParams(
            # Each step writes its own output block -> truly parallel axis
            # (megacore-shardable on v7x; no-op on v5e/v6e).
            dimension_semantics=("parallel",),
            # 2 inputs x double-buffered x <=4 MiB blocks = <=16 MiB, plus
            # small strip temporaries; 32 MiB is safe on all generations.
            vmem_limit_bytes=32 * 1024 * 1024,
        ),
        cost_estimate=cost,
    )(pred2d, tar2d)
    return jnp.sum(inter_parts), jnp.sum(union_parts)


def dice_loss(predict, target, *, epsilon=1e-5, max_block_rows=8192):
    """Dice loss (1 - dice score), matching the PyTorch DiceLoss.forward."""
    assert predict.shape == target.shape, (
        "the size of predict and target must be equal.")
    total = predict.size

    def _streamable(x):
        # Stream these dtypes as-is (upcast in-kernel); cast anything exotic.
        if x.dtype in (jnp.float32, jnp.bfloat16, jnp.float16,
                       jnp.int8, jnp.uint8):
            return x
        # TODO(synk): bool / 64-bit inputs fall back to one f32 cast pass.
        return x.astype(jnp.float32)

    flat_p = _streamable(predict).reshape(-1)
    flat_t = _streamable(target).reshape(-1)

    align = max(_row_align(flat_p.dtype), _row_align(flat_t.dtype))
    rows = total // _LANES                      # full 128-lane rows

    inter = jnp.float32(0.0)
    union = jnp.float32(0.0)

    use_kernel = rows >= align
    if use_kernel:
        mbr = max(align, max_block_rows)
        # grid >= 2 so both v7x TensorCores get work on medium inputs.
        want_grid = max(2, _cdiv(rows, mbr))
        block_rows = _round_up(min(mbr, _cdiv(rows, want_grid)), align)
        if block_rows > _STRIP_ROWS:
            block_rows = _round_up(block_rows, _STRIP_ROWS)
            strip = _STRIP_ROWS
        else:
            strip = block_rows
        grid = _cdiv(rows, block_rows)

        bulk = rows * _LANES
        pred2d = flat_p[:bulk].reshape(rows, _LANES)
        tar2d = flat_t[:bulk].reshape(rows, _LANES)
        k_inter, k_union = _dice_partial_sums(
            pred2d, tar2d, rows, block_rows, strip, grid)
        inter = inter + k_inter
        union = union + k_union
        tail_start = bulk
    else:
        tail_start = 0

    if tail_start < total:
        # < 128 leftover elements (or a tiny whole input): plain XLA ops.
        tp = flat_p[tail_start:].astype(jnp.float32)
        tt = flat_t[tail_start:].astype(jnp.float32)
        ts = jax.nn.sigmoid(tp)
        inter = inter + jnp.sum(ts * tt)
        union = union + jnp.sum(ts + tt)

    eps = jnp.float32(epsilon)
    return jnp.float32(1.0) - jnp.float32(2.0) * (inter + eps) / (union + eps)


def _dice_loss_ref(predict, target, epsilon=1e-5):
    n = predict.shape[0]
    pre = jax.nn.sigmoid(predict.astype(jnp.float32)).reshape(n, -1)
    tar = target.astype(jnp.float32).reshape(n, -1)
    intersection = (pre * tar).sum(-1).sum()
    union = (pre + tar).sum(-1).sum()
    return 1.0 - 2.0 * (intersection + epsilon) / (union + epsilon)


if __name__ == "__main__":
    key = jax.random.PRNGKey(0)
    k1, k2, k3, k4, k5, k6 = jax.random.split(key, 6)

    dice = jax.jit(dice_loss)

    # Primary NCHW case: batch=2, channels=4, spatial=16x16 (2048 elements).
    p1 = jax.random.normal(k1, (2, 4, 16, 16), dtype=jnp.float32)
    t1 = (jax.random.uniform(k2, (2, 4, 16, 16)) > 0.5).astype(jnp.float32)
    s1 = jax.block_until_ready(dice(p1, t1))
    r1 = _dice_loss_ref(p1, t1)
    assert jnp.allclose(s1, r1, atol=1e-5, rtol=1e-5), (s1, r1)

    # Target streamed natively as bf16 (exact for 0/1 labels, no wrapper cast
    # of predict); also exercises a partial (masked) last block.
    p2 = jax.random.normal(k3, (2, 4, 24, 24), dtype=jnp.float32)
    t2 = (jax.random.uniform(k4, (2, 4, 24, 24)) > 0.5).astype(jnp.bfloat16)
    s2 = jax.block_until_ready(dice(p2, t2))
    r2 = _dice_loss_ref(p2, t2)
    assert jnp.allclose(s2, r2, atol=1e-5, rtol=1e-5), (s2, r2)

    # Ragged case: partial last block + <128-element flat tail (XLA tail path).
    p3 = jax.random.normal(k5, (2, 3, 15, 17), dtype=jnp.float32)
    t3 = (jax.random.uniform(k6, (2, 3, 15, 17)) > 0.5).astype(jnp.float32)
    s3 = jax.block_until_ready(dice(p3, t3))
    r3 = _dice_loss_ref(p3, t3)
    assert jnp.allclose(s3, r3, atol=1e-5, rtol=1e-5), (s3, r3)

    # Tiny input (< 1 lane row of data): pure-XLA fallback path.
    p4 = jax.random.normal(k1, (1, 1, 4, 8), dtype=jnp.float32)
    t4 = (jax.random.uniform(k2, (1, 1, 4, 8)) > 0.5).astype(jnp.float32)
    s4 = jax.block_until_ready(dice(p4, t4))
    r4 = _dice_loss_ref(p4, t4)
    assert jnp.allclose(s4, r4, atol=1e-5, rtol=1e-5), (s4, r4)

    print("KERNEL_OK")
</pallas_src>

<mosaic_0001>
module attributes {stable_mosaic.version = 11 : i64} {
  func.func @kernel(%arg0: i32, %arg1: memref<8x128xf32, #tpu.memory_space<vmem>>, %arg2: memref<8x128xf32, #tpu.memory_space<vmem>>, %arg3: memref<8x128xf32, #tpu.memory_space<vmem>>, %arg4: memref<8x128xf32, #tpu.memory_space<vmem>>) attributes {dimension_semantics = [#tpu.dimension_semantics<parallel>], iteration_bounds = array<i64: 2>, scalar_prefetch = 0 : i64, scratch_operands = 0 : i64, tpu.core_type = #tpu.core_type<tc>, window_params = [{transform_indices = @transform_0, window_bounds = array<i64: 8, 128>}, {transform_indices = @transform_1, window_bounds = array<i64: 8, 128>}, {transform_indices = @transform_2, window_bounds = array<i64: 8, 128>}, {transform_indices = @transform_3, window_bounds = array<i64: 8, 128>}]} {
    %cst = arith.constant 0.000000e+00 : f32
    %0 = vector.broadcast %cst : f32 to vector<8x128xf32>
    %c0 = arith.constant 0 : index
    %c0_0 = arith.constant 0 : index
    %1 = vector.load %arg3[%c0, %c0_0] : memref<8x128xf32, #tpu.memory_space<vmem>>, vector<8x128xf32>
    tpu.vector_store %arg3[%c0, %c0_0], %0 {strides = array<i32>} : memref<8x128xf32, #tpu.memory_space<vmem>>, vector<8x128xf32>,
    %cst_1 = arith.constant 0.000000e+00 : f32
    %2 = vector.broadcast %cst_1 : f32 to vector<8x128xf32>
    %c0_2 = arith.constant 0 : index
    %c0_3 = arith.constant 0 : index
    %3 = vector.load %arg4[%c0_2, %c0_3] : memref<8x128xf32, #tpu.memory_space<vmem>>, vector<8x128xf32>
    tpu.vector_store %arg4[%c0_2, %c0_3], %2 {strides = array<i32>} : memref<8x128xf32, #tpu.memory_space<vmem>>, vector<8x128xf32>,
    %c0_i32 = arith.constant 0 : i32
    %c8_i32 = arith.constant 8 : i32
    %4 = arith.muli %c0_i32, %c8_i32 : i32
    %5 = tpu.assume_multiple %4, 8 : i32
    %6 = arith.index_cast %5 : i32 to index
    %c0_4 = arith.constant 0 : index
    %7 = vector.load %arg1[%6, %c0_4] : memref<8x128xf32, #tpu.memory_space<vmem>>, vector<8x128xf32>
    %8 = arith.index_cast %5 : i32 to index
    %c0_5 = arith.constant 0 : index
    %9 = vector.load %arg2[%8, %c0_5] : memref<8x128xf32, #tpu.memory_space<vmem>>, vector<8x128xf32>
    %cst_6 = arith.constant 5.000000e-01 : f32
    %10 = vector.broadcast %cst_6 : f32 to vector<8x128xf32>
    %11 = arith.mulf %10, %7 : vector<8x128xf32>
    %12 = math.tanh %11 : vector<8x128xf32>
    %cst_7 = arith.constant 5.000000e-01 : f32
    %13 = vector.broadcast %cst_7 : f32 to vector<8x128xf32>
    %14 = arith.mulf %13, %12 : vector<8x128xf32>
    %cst_8 = arith.constant 5.000000e-01 : f32
    %15 = vector.broadcast %cst_8 : f32 to vector<8x128xf32>
    %16 = arith.addf %14, %15 : vector<8x128xf32>
    %17 = vector.shape_cast %16 : vector<8x128xf32> to vector<1x8x128xf32>
    %18 = vector.shape_cast %9 : vector<8x128xf32> to vector<1x8x128xf32>
    %c0_9 = arith.constant 0 : index
    %c0_10 = arith.constant 0 : index
    %19 = vector.load %arg3[%c0_9, %c0_10] : memref<8x128xf32, #tpu.memory_space<vmem>>, vector<8x128xf32>
    %20 = arith.mulf %17, %18 : vector<1x8x128xf32>
    %cst_11 = arith.constant dense<0.000000e+00> : vector<8x128xf32>
    %21 = vector.multi_reduction <add>, %20, %cst_11 [0] : vector<1x8x128xf32> to vector<8x128xf32>
    %22 = arith.addf %19, %21 : vector<8x128xf32>
    %c0_12 = arith.constant 0 : index
    %c0_13 = arith.constant 0 : index
    %23 = vector.load %arg3[%c0_12, %c0_13] : memref<8x128xf32, #tpu.memory_space<vmem>>, vector<8x128xf32>
    tpu.vector_store %arg3[%c0_12, %c0_13], %22 {strides = array<i32>} : memref<8x128xf32, #tpu.memory_space<vmem>>, vector<8x128xf32>,
    %c0_14 = arith.constant 0 : index
    %c0_15 = arith.constant 0 : index
    %24 = vector.load %arg4[%c0_14, %c0_15] : memref<8x128xf32, #tpu.memory_space<vmem>>, vector<8x128xf32>
    %25 = arith.addf %17, %18 : vector<1x8x128xf32>
    %cst_16 = arith.constant dense<0.000000e+00> : vector<8x128xf32>
    %26 = vector.multi_reduction <add>, %25, %cst_16 [0] : vector<1x8x128xf32> to vector<8x128xf32>
    %27 = arith.addf %24, %26 : vector<8x128xf32>
    %c0_17 = arith.constant 0 : index
    %c0_18 = arith.constant 0 : index
    %28 = vector.load %arg4[%c0_17, %c0_18] : memref<8x128xf32, #tpu.memory_space<vmem>>, vector<8x128xf32>
    tpu.vector_store %arg4[%c0_17, %c0_18], %27 {strides = array<i32>} : memref<8x128xf32, #tpu.memory_space<vmem>>, vector<8x128xf32>,
    %c1_i32 = arith.constant 1 : i32
    return
  }
  func.func @transform_0(%arg0: i32) -> (i32, i32) {
    %c0_i32 = arith.constant 0 : i32
    %c0_i32_0 = arith.constant 0 : i32
    return %arg0, %c0_i32 : i32, i32
  }
  func.func @transform_1(%arg0: i32) -> (i32, i32) {
    %c0_i32 = arith.constant 0 : i32
    %c0_i32_0 = arith.constant 0 : i32
    return %arg0, %c0_i32 : i32, i32
  }
  func.func @transform_2(%arg0: i32) -> (i32, i32) {
    %c0_i32 = arith.constant 0 : i32
    %c0_i32_0 = arith.constant 0 : i32
    return %arg0, %c0_i32 : i32, i32
  }
  func.func @transform_3(%arg0: i32) -> (i32, i32) {
    %c0_i32 = arith.constant 0 : i32
    %c0_i32_0 = arith.constant 0 : i32
    return %arg0, %c0_i32 : i32, i32
  }
}

</mosaic_0001>

<llo_original>
// kernel: dice_loss.1
$region0: #{dice_loss.1}
  #allocation0 [shape = 'u32[]', space=smem, size = 0x4, offset = 0x4, fixed_abs, tag = 'smem constant byte address 0x4 - core index']
  #allocation1 [shape = 'u32[144,128]{1,0:T(1,128)}', space=vmem, size = 0x12000, scoped, tag = 'internal scratch']
  %s0 = inlined_call_operand.vmem [shape: f32[16,128], index: 0, kind: input, shape index: {}]
  %s1 = inlined_call_operand.vmem [shape: f32[16,128], index: 1, kind: input, shape index: {}]
  %s2 = inlined_call_operand.vmem [shape: f32[16,128], index: 2, kind: output, shape index: {0}]
  %s3 = inlined_call_operand.vmem [shape: f32[16,128], index: 3, kind: output, shape index: {1}]
  %4 = xla_tuple %s2, %s3
  %s5 = sld [smem:[#allocation0]]
  $region49: #{dice_loss.1} parent=0
    _
  %s7 = ssub.s32 1, %s5
  %s8 = scalar_select 0, %s7, %s5
  loop: start=0, step=1, limit=4
  $region2: #{dice_loss.1} parent=0 // loop_pre_header
    _
  $region3: #{dice_loss.1} parent=0 // loop_header
    %s10 = sphi 0, %s14
    %p11 = scmp.ge.s32.totalorder %s10, 4
    %s20 = sphi 0, %s22
    %s23 = sphi 0, %s20
    %s24 = sphi 0, %s23
    %s40 = sphi 0, %s24
    %s46 = sphi 0, %s48
    %s49 = sphi 0, %s46
    %s50 = sphi 0, %s49
    %s66 = sphi 0, %s50
    %s72 = sphi 0, %s74
    %s75 = sphi 0, %s72
    %s76 = sphi 0, %s75
    %s92 = sphi 0, %s76
    %s98 = sphi 0, %s100
    %s101 = sphi 0, %s98
    %s102 = sphi 0, %s101
    %s118 = sphi 0, %s102
  $region4: #{dice_loss.1} parent=0 // loop_header_branch
    %13 = sbr.rel (%p11) target = $region8
  $region5: #{dice_loss.1} parent=0 // loop_body
    %s15 = ssub.s32 %s10, 1
    %s16 = ssub.s32 %s10, 2
    %s17 = sadd.s32 %s10, 1
    %s18 = ssub.s32 %s10, %s17
    %p19 = scmp.eq.s32.totalorder %s18, 0
    %s21 = sadd.s32 %s20, 1
    %s22 = scalar_select %p19, %s20, %s21
    %p25 = pneg %p19
    %p26 = scmp.eq.s32.totalorder %s10, 1
    %p27 = por %p25, %p26
    %p28 = scmp.ne.s32.totalorder %s20, %s23
    %p29 = scmp.eq.s32.totalorder %s10, 0
    %p30 = por %p28, %p29
    %p31 = scmp.ne.s32.totalorder %s20, %s23
    %p32 = scmp.eq.s32.totalorder %s15, 1
    %p33 = por %p31, %p32
    %p34 = scmp.ne.s32.totalorder %s23, %s24
    %p35 = scmp.eq.s32.totalorder %s15, 0
    %p36 = por %p34, %p35
    %p37 = scmp.ne.s32.totalorder %s23, %s24
    %p38 = scmp.eq.s32.totalorder %s16, 1
    %p39 = por %p37, %p38
    %p41 = scmp.ne.s32.totalorder %s24, %s40
    %p42 = scmp.eq.s32.totalorder %s16, 0
    %p43 = por %p41, %p42
    %s44 = ssub.s32 %s10, %s17
    %p45 = scmp.eq.s32.totalorder %s44, 0
    %s47 = sadd.s32 %s46, 1
    %s48 = scalar_select %p45, %s46, %s47
    %p51 = pneg %p45
    %p52 = scmp.eq.s32.totalorder %s10, 1
    %p53 = por %p51, %p52
    %p54 = scmp.ne.s32.totalorder %s46, %s49
    %p55 = scmp.eq.s32.totalorder %s10, 0
    %p56 = por %p54, %p55
    %p57 = scmp.ne.s32.totalorder %s46, %s49
    %p58 = scmp.eq.s32.totalorder %s15, 1
    %p59 = por %p57, %p58
    %p60 = scmp.ne.s32.totalorder %s49, %s50
    %p61 = scmp.eq.s32.totalorder %s15, 0
    %p62 = por %p60, %p61
    %p63 = scmp.ne.s32.totalorder %s49, %s50
    %p64 = scmp.eq.s32.totalorder %s16, 1
    %p65 = por %p63, %p64
    %p67 = scmp.ne.s32.totalorder %s50, %s66
    %p68 = scmp.eq.s32.totalorder %s16, 0
    %p69 = por %p67, %p68
    %s70 = ssub.s32 %s10, %s17
    %p71 = scmp.eq.s32.totalorder %s70, 0
    %s73 = sadd.s32 %s72, 1
    %s74 = scalar_select %p71, %s72, %s73
    %p77 = pneg %p71
    %p78 = scmp.eq.s32.totalorder %s10, 1
    %p79 = por %p77, %p78
    %p80 = scmp.ne.s32.totalorder %s72, %s75
    %p81 = scmp.eq.s32.totalorder %s10, 0
    %p82 = por %p80, %p81
    %p83 = scmp.ne.s32.totalorder %s72, %s75
    %p84 = scmp.eq.s32.totalorder %s15, 1
    %p85 = por %p83, %p84
    %p86 = scmp.ne.s32.totalorder %s75, %s76
    %p87 = scmp.eq.s32.totalorder %s15, 0
    %p88 = por %p86, %p87
    %p89 = scmp.ne.s32.totalorder %s75, %s76
    %p90 = scmp.eq.s32.totalorder %s16, 1
    %p91 = por %p89, %p90
    %p93 = scmp.ne.s32.totalorder %s76, %s92
    %p94 = scmp.eq.s32.totalorder %s16, 0
    %p95 = por %p93, %p94
    %s96 = ssub.s32 %s10, %s17
    %p97 = scmp.eq.s32.totalorder %s96, 0
    %s99 = sadd.s32 %s98, 1
    %s100 = scalar_select %p97, %s98, %s99
    %p103 = pneg %p97
    %p104 = scmp.eq.s32.totalorder %s10, 1
    %p105 = por %p103, %p104
    %p106 = scmp.ne.s32.totalorder %s98, %s101
    %p107 = scmp.eq.s32.totalorder %s10, 0
    %p108 = por %p106, %p107
    %p109 = scmp.ne.s32.totalorder %s98, %s101
    %p110 = scmp.eq.s32.totalorder %s15, 1
    %p111 = por %p109, %p110
    %p112 = scmp.ne.s32.totalorder %s101, %s102
    %p113 = scmp.eq.s32.totalorder %s15, 0
    %p114 = por %p112, %p113
    %p115 = scmp.ne.s32.totalorder %s101, %s102
    %p116 = scmp.eq.s32.totalorder %s16, 1
    %p117 = por %p115, %p116
    %p119 = scmp.ne.s32.totalorder %s102, %s118
    %p120 = scmp.eq.s32.totalorder %s16, 0
    %p121 = por %p119, %p120
    %p122 = scmp.le.s32.totalorder 1, %s10
    %p123 = scmp.lt.s32.totalorder %s10, 3
    %p124 = pnand %p122, %p123
    %p125 = pneg %p124
    // Predicated region
    $region9: #{dice_loss.1} parent=5 // pred_check
      _
    $region10: #{dice_loss.1} parent=5 // pred_check_branch
      %127 = sbr.rel (%p124) target = $region12
    $region11: #{dice_loss.1} parent=5 // pred_region
      %s128 = ssub.s32 %s10, 1
    $region12: #{dice_loss.1} parent=5 // pred_fallthru
      _
    %p129 = scmp.lt.s32.totalorder %s10, 2
    // Predicated region
    $region13: #{dice_loss.1} parent=5 // pred_check
      %p130 = pneg %p129
    $region14: #{dice_loss.1} parent=5 // pred_check_branch
      %132 = sbr.rel (%p130) target = $region16
    $region15: #{dice_loss.1} parent=5 // pred_region
      // Predicated region
      $region17: #{dice_loss.1} parent=15 // pred_check
        %p133 = pneg %p30
      $region18: #{dice_loss.1} parent=15 // pred_check_branch
        %135 = sbr.rel (%p133) target = $region20
      $region19: #{dice_loss.1} parent=15 // pred_region
        %p136 = scmp.lt.s32.totalorder %s10, 1
        %s137 = scalar_select %p136, %s10, 1
        %s138 = smul.addr %s137, 8
        %s139 = scalar_lea.vmem %s0, %s138
      $region20: #{dice_loss.1} parent=15 // pred_fallthru
        _
      // Predicated region
      $region21: #{dice_loss.1} parent=15 // pred_check
        %p140 = pneg %p56
      $region22: #{dice_loss.1} parent=15 // pred_check_branch
        %142 = sbr.rel (%p140) target = $region24
      $region23: #{dice_loss.1} parent=15 // pred_region
        %p143 = scmp.lt.s32.totalorder %s10, 1
        %s144 = scalar_select %p143, %s10, 1
        %s145 = smul.addr %s144, 8
        %s146 = scalar_lea.vmem %s1, %s145
      $region24: #{dice_loss.1} parent=15 // pred_fallthru
        _
    $region16: #{dice_loss.1} parent=5 // pred_fallthru
      _
    %p147 = scmp.le.s32.totalorder 1, %s10
    %p148 = scmp.lt.s32.totalorder %s10, 3
    %p149 = pnand %p147, %p148
    %p150 = pneg %p149
    // Predicated region
    $region25: #{dice_loss.1} parent=5 // pred_check
      _
    $region26: #{dice_loss.1} parent=5 // pred_check_branch
      %152 = sbr.rel (%p149) target = $region28
    $region27: #{dice_loss.1} parent=5 // pred_region
      %s153 = ssub.s32 %s10, 1
      %p154 = scmp.lt.s32.totalorder %s15, 1
      %s155 = scalar_select %p154, %s15, 1
      %s156 = smul.addr %s155, 8
      %s157 = scalar_lea.vmem %s0, %s156
      %p158 = pneg %p36
      %p159 = pneg %p33
      %p160 = scmp.lt.s32.totalorder %s15, 1
      %s161 = scalar_select %p160, %s15, 1
      %s162 = smul.addr %s161, 8
      %s163 = scalar_lea.vmem %s1, %s162
      %p164 = pneg %p62
      %p165 = pneg %p59
      %p166 = pneg %p88
      %p167 = pneg %p85
      %p168 = scmp.lt.s32.totalorder %s15, 1
      %s169 = scalar_select %p168, %s15, 1
      %s170 = smul.addr %s169, 8
      %s171 = scalar_lea.vmem %s2, %s170
      %p172 = pneg %p114
      %p173 = pneg %p111
      %p174 = scmp.lt.s32.totalorder %s15, 1
      %s175 = scalar_select %p174, %s15, 1
      %s176 = smul.addr %s175, 8
      %s177 = scalar_lea.vmem %s3, %s176
      %p178 = scmp.lt.s32.totalorder %s15, 1
      %s179 = scalar_select %p178, %s15, 1
      %s180 = smul.addr %s179, 8
      %s181 = scalar_lea.vmem %s0, %s180
      %p182 = scmp.lt.s32.totalorder %s15, 1
      %s183 = scalar_select %p182, %s15, 1
      %s184 = smul.addr %s183, 8
      %s185 = scalar_lea.vmem %s1, %s184
      %p186 = scmp.lt.s32.totalorder %s15, 1
      %s187 = scalar_select %p186, %s15, 1
      %s188 = smul.addr %s187, 8
      %s189 = scalar_lea.vmem %s2, %s188
      %p190 = scmp.lt.s32.totalorder %s15, 1
      %s191 = scalar_select %p190, %s15, 1
      %s192 = smul.addr %s191, 8
      %s193 = scalar_lea.vmem %s3, %s192
      %194 = vst [vmem:[%s189] sm:$0xff] 0.0
      %195 = vst [vmem:[%s193] sm:$0xff] 0.0
      %v196 = vld [vmem:[%s181] sm:$0xff]
      %v197 = vld [vmem:[%s185] sm:$0xff]
      %v198 = vmul.f32 %v196, 0.5
      %v199 = vtanh.pop %v198
      %v200 = vmul.f32 %v199, 0.5
      %v201 = vadd.f32 %v200, 0.5
      %v202 = vld [vmem:[%s189] sm:$0xff]
      %v203 = vmul.f32 %v201, %v197
      %v204 = vadd.f32 %v203, 0.0
      %v205 = vadd.f32 %v202, %v204
      %206 = vst [vmem:[%s189] sm:$0xff] %v205
      %v207 = vld [vmem:[%s193] sm:$0xff]
      %v208 = vadd.f32 %v201, %v197
      %v209 = vadd.f32 %v208, 0.0
      %v210 = vadd.f32 %v207, %v209
      %211 = vst [vmem:[%s193] sm:$0xff] %v210
      %p212 = scmp.lt.s32.totalorder %s15, 1
      %s213 = scalar_select %p212, %s15, 1
      %s214 = smul.addr %s213, 8
      %s215 = scalar_lea.vmem %s2, %s214
      %p216 = scmp.lt.s32.totalorder %s15, 1
      %s217 = scalar_select %p216, %s15, 1
      %s218 = smul.addr %s217, 8
      %s219 = scalar_lea.vmem %s3, %s218
      // Predicated region
      $region29: #{dice_loss.1} parent=27 // pred_check
        %p220 = pneg %p85
      $region30: #{dice_loss.1} parent=27 // pred_check_branch
        %222 = sbr.rel (%p220) target = $region32
      $region31: #{dice_loss.1} parent=27 // pred_region
        _
      $region32: #{dice_loss.1} parent=27 // pred_fallthru
        _
      // Predicated region
      $region33: #{dice_loss.1} parent=27 // pred_check
        %p223 = pneg %p111
      $region34: #{dice_loss.1} parent=27 // pred_check_branch
        %225 = sbr.rel (%p223) target = $region36
      $region35: #{dice_loss.1} parent=27 // pred_region
        _
      $region36: #{dice_loss.1} parent=27 // pred_fallthru
        _
    $region28: #{dice_loss.1} parent=5 // pred_fallthru
      _
    %p226 = scmp.le.s32.totalorder 2, %s10
    // Predicated region
    $region37: #{dice_loss.1} parent=5 // pred_check
      %p227 = pneg %p226
    $region38: #{dice_loss.1} parent=5 // pred_check_branch
      %229 = sbr.rel (%p227) target = $region40
    $region39: #{dice_loss.1} parent=5 // pred_region
      %s230 = ssub.s32 %s10, 2
      // Predicated region
      $region41: #{dice_loss.1} parent=39 // pred_check
        %p231 = pneg %p91
      $region42: #{dice_loss.1} parent=39 // pred_check_branch
        %233 = sbr.rel (%p231) target = $region44
      $region43: #{dice_loss.1} parent=39 // pred_region
        %p234 = scmp.lt.s32.totalorder %s16, 1
        %s235 = scalar_select %p234, %s16, 1
        %s236 = smul.addr %s235, 8
        %s237 = scalar_lea.vmem %s2, %s236
      $region44: #{dice_loss.1} parent=39 // pred_fallthru
        _
      // Predicated region
      $region45: #{dice_loss.1} parent=39 // pred_check
        %p238 = pneg %p117
      $region46: #{dice_loss.1} parent=39 // pred_check_branch
        %240 = sbr.rel (%p238) target = $region48
      $region47: #{dice_loss.1} parent=39 // pred_region
        %p241 = scmp.lt.s32.totalorder %s16, 1
        %s242 = scalar_select %p241, %s16, 1
        %s243 = smul.addr %s242, 8
        %s244 = scalar_lea.vmem %s3, %s243
      $region48: #{dice_loss.1} parent=39 // pred_fallthru
        _
    $region40: #{dice_loss.1} parent=5 // pred_fallthru
      _
  $region6: #{dice_loss.1} parent=0 // loop_footer
    %s14 = sadd.s32 1, %s10
  $region7: #{dice_loss.1} parent=0 // loop_footer_branch
    %9 = sbr.rel target = $region3
  $region8: #{dice_loss.1} parent=0 // loop_exit
    _

</llo_original>
